<compile_context>
chip_gen: v7x
topology: tpu7x:2x2x1
jax: 0.10.0
libtpu: 0.0.40
codegen_flags: <defaults>
</compile_context>

<pallas_src>
import functools

import jax
import jax.numpy as jnp
from jax.experimental import pallas as pl
from jax.experimental.pallas import tpu as pltpu


def _round_up(n: int, m: int) -> int:
    return ((n + m - 1) // m) * m


def _cdiv(a: int, b: int) -> int:
    return -(-a // b)


@functools.lru_cache(maxsize=1)
def _vmem_capacity_bytes() -> int:
    """Physical VMEM capacity of the local TPU (clamped to sane bounds)."""
    try:
        cap = int(pltpu.get_tpu_info().vmem_capacity_bytes)
    except Exception:
        cap = 64 * 2**20  # conservative fallback (v7x per-TC size)
    return max(32 * 2**20, min(cap, 128 * 2**20))


def _swish_f32(v):
    # swish(v) = sigmoid(v) * v, written as 0.5*v*(tanh(0.5*v)+1) so each
    # swish costs a single EUP push (no exp + full-precision divide).
    return 0.5 * v * (jnp.tanh(0.5 * v) + 1.0)


def residual_block_kernel(x_ref, w1_ref, b1_ref, w2_ref, b2_ref, o_ref):
    # x tile: (TM, Dp) in its I/O dtype (f32 or bf16).  Weights: (Dp, Dp)
    # bf16, VMEM-resident across the whole grid (constant index_map).
    x = x_ref[...]
    x_f32 = x.astype(jnp.float32)

    # Linear 1 (bf16 MXU inputs, f32 accumulate) + bias + swish (f32).
    h = jnp.dot(x.astype(jnp.bfloat16), w1_ref[...],
                preferred_element_type=jnp.float32) + b1_ref[...]
    h = _swish_f32(h)

    # Linear 2 (bf16 MXU inputs, f32 accumulate) + bias.
    z = jnp.dot(h.astype(jnp.bfloat16), w2_ref[...],
                preferred_element_type=jnp.float32) + b2_ref[...]

    # Residual add + swish in f32; cast only at the store.
    o_ref[...] = _swish_f32(x_f32 + z).astype(o_ref.dtype)


def prepare_params(w1, b1, w2, b2):
    """One-time parameter preparation (do NOT call per forward pass):
    zero-pad to the lane-aligned Dp and cast weights to bf16.  w1/w2 are
    (dim_in, dim_out), i.e. already W^T relative to PyTorch nn.Linear."""
    D = w1.shape[0]
    Dp = _round_up(max(D, 128), 128)
    bf16, f32 = jnp.bfloat16, jnp.float32
    w1p = jnp.zeros((Dp, Dp), bf16).at[:D, :D].set(w1.astype(bf16))
    w2p = jnp.zeros((Dp, Dp), bf16).at[:D, :D].set(w2.astype(bf16))
    b1p = jnp.zeros((1, Dp), f32).at[0, :D].set(b1.astype(f32))
    b2p = jnp.zeros((1, Dp), f32).at[0, :D].set(b2.astype(f32))
    return w1p, b1p, w2p, b2p


@functools.partial(jax.jit, static_argnames=("tm", "out_dtype"))
def residual_block(x, w1p, b1p, w2p, b2p, *, tm=None, out_dtype=None):
    """x: (B, D), f32 or bf16.  w1p/w2p: (Dp, Dp) bf16 pre-padded, (in, out)
    layout.  b1p/b2p: (1, Dp) f32 pre-padded (see prepare_params)."""
    B, D = x.shape
    Dp = w1p.shape[0]
    assert w1p.shape == (Dp, Dp) and w2p.shape == (Dp, Dp)
    assert b1p.shape == (1, Dp) and b2p.shape == (1, Dp)
    assert D <= Dp and Dp % 128 == 0

    if out_dtype is None:
        out_dtype = x.dtype
    x_isz = jnp.dtype(x.dtype).itemsize
    o_isz = jnp.dtype(out_dtype).itemsize

    # ---- generation-aware VMEM budget --------------------------------------
    vmem_cap = _vmem_capacity_bytes()
    budget = int(0.75 * vmem_cap)       # footprint target (leaves headroom)
    vmem_limit = int(0.85 * vmem_cap)   # scoped limit handed to Mosaic

    weight_bytes = 2 * Dp * Dp * 2      # two bf16 (Dp, Dp) matrices, one copy
    bias_bytes = 2 * Dp * 4

    def footprint(tm_, weight_copies):
        io = 2 * tm_ * Dp * (x_isz + o_isz)   # double-buffered x / out tiles
        scratch = 5 * tm_ * Dp * 4            # h / z / residual / bf16 temps
        return weight_copies * weight_bytes + 2 * bias_bytes + io + scratch

    # Default tile: large on 128 MiB parts (v5e/v6e), smaller on 64 MiB v7x.
    if tm is None:
        if vmem_cap >= 100 * 2**20:
            tm = 1024
        else:
            tm = 256 if Dp >= 2048 else 512

    # Shrink TM until the conservative (weights x2) footprint fits the budget.
    tm_eff = max(8, _round_up(min(tm, _round_up(B, 8)), 8))
    while footprint(tm_eff, weight_copies=2) > budget and tm_eff > 128:
        tm_eff = max(128, _round_up(tm_eff // 2, 8))
    if footprint(min(tm_eff, 128), weight_copies=1) > budget:
        # TODO(synk): for very large dim, stream W1/W2 column tiles from HBM
        # (memory_space=pl.ANY + pltpu.emit_pipeline) instead of requiring
        # fully VMEM-resident weights.
        raise NotImplementedError(
            f"dim={D} (padded {Dp}) needs VMEM-resident weights larger than "
            f"the ~{budget >> 20} MiB budget on this TPU generation.")

    # Adaptive batch tiling: minimal padding, and >= 2 tiles for large
    # batches so the "parallel" axis can occupy both TensorCores on v7x.
    n_tiles = max(1, _cdiv(B, tm_eff))
    if n_tiles == 1 and B >= 256:
        n_tiles = 2
    TM = max(8, _round_up(_cdiv(B, n_tiles), 8))
    n_tiles = _cdiv(B, TM)
    Bp = n_tiles * TM

    # Fast path: no pad copy when already aligned.  Zero-padding is exact:
    # padded weight rows/cols and bias entries are zero, so the valid region
    # of h, z and out is unchanged.
    aligned = (Bp == B) and (Dp == D)
    if aligned:
        xp = x
    else:
        xp = jnp.zeros((Bp, Dp), x.dtype).at[:B, :D].set(x)

    cost = pl.CostEstimate(
        flops=2 * 2 * Bp * Dp * Dp,                 # two matmuls
        transcendentals=2 * Bp * Dp,                # two swish tanh pushes
        bytes_accessed=Bp * Dp * (x_isz + o_isz) + weight_bytes + bias_bytes,
    )

    out_padded = pl.pallas_call(
        residual_block_kernel,
        out_shape=jax.ShapeDtypeStruct((Bp, Dp), out_dtype),
        grid_spec=pltpu.PrefetchScalarGridSpec(
            num_scalar_prefetch=0,
            grid=(n_tiles,),
            in_specs=[
                pl.BlockSpec((TM, Dp), lambda i: (i, 0)),   # x: batch-tiled
                # W1/b1/W2/b2: constant index_map -> VMEM-resident across the
                # grid (footprint above conservatively counts two buffers;
                # pipeline_mode=pl.Buffered(1) would drop the second one).
                pl.BlockSpec((Dp, Dp), lambda i: (0, 0)),   # w1
                pl.BlockSpec((1, Dp), lambda i: (0, 0)),    # b1
                pl.BlockSpec((Dp, Dp), lambda i: (0, 0)),   # w2
                pl.BlockSpec((1, Dp), lambda i: (0, 0)),    # b2
            ],
            out_specs=pl.BlockSpec((TM, Dp), lambda i: (i, 0)),
        ),
        compiler_params=pltpu.CompilerParams(
            dimension_semantics=("parallel",),
            vmem_limit_bytes=vmem_limit,
        ),
        cost_estimate=cost,
    )(xp, w1p, b1p, w2p, b2p)

    if aligned:
        return out_padded          # fast path: no slice copy
    return out_padded[:B, :D]


# ----------------------------- references -----------------------------------

def residual_block_ref_bf16(x, w1, b1, w2, b2):
    """Mirrors the kernel's bf16-input / f32-accumulate MXU dots."""
    h = jnp.dot(x.astype(jnp.bfloat16), w1.astype(jnp.bfloat16),
                preferred_element_type=jnp.float32) + b1
    h = jax.nn.sigmoid(h) * h
    z = jnp.dot(h.astype(jnp.bfloat16), w2.astype(jnp.bfloat16),
                preferred_element_type=jnp.float32) + b2
    r = x + z
    return jax.nn.sigmoid(r) * r


def residual_block_ref_f32(x, w1, b1, w2, b2):
    h = x @ w1 + b1
    h = jax.nn.sigmoid(h) * h
    z = h @ w2 + b2
    r = x + z
    return jax.nn.sigmoid(r) * r


if __name__ == "__main__":
    key = jax.random.PRNGKey(0)
    batch, dim = 8, 32

    k_x, k_w1, k_b1, k_w2, k_b2, k_x2 = jax.random.split(key, 6)
    bound = 1.0 / jnp.sqrt(dim)  # matches nn.Linear default init range

    x = jax.random.normal(k_x, (batch, dim), dtype=jnp.float32)
    # Weights stored as (dim_in, dim_out), i.e. already W^T vs. PyTorch.
    w1 = jax.random.uniform(k_w1, (dim, dim), jnp.float32, -bound, bound)
    b1 = jax.random.uniform(k_b1, (dim,), jnp.float32, -bound, bound)
    w2 = jax.random.uniform(k_w2, (dim, dim), jnp.float32, -bound, bound)
    b2 = jax.random.uniform(k_b2, (dim,), jnp.float32, -bound, bound)

    # One-time parameter prep (pad + bf16 cast); reused across forward calls.
    params = prepare_params(w1, b1, w2, b2)

    # f32 I/O path.
    out = jax.block_until_ready(residual_block(x, *params))
    assert out.shape == (batch, dim) and out.dtype == x.dtype

    ref_bf16 = residual_block_ref_bf16(x, w1, b1, w2, b2)
    assert jnp.allclose(out, ref_bf16, atol=1e-3, rtol=1e-3), \
        "mismatch vs bf16-precision reference"
    ref_f32 = residual_block_ref_f32(x, w1, b1, w2, b2)
    assert jnp.allclose(out, ref_f32, atol=5e-2, rtol=5e-2), \
        "mismatch vs f32 reference beyond bf16 rounding budget"

    # bf16 I/O path (bandwidth-bound small-D regime): stream x/out in bf16.
    x2 = jax.random.normal(k_x2, (16, dim), dtype=jnp.float32)
    x2_bf16 = x2.astype(jnp.bfloat16)
    out_b = jax.block_until_ready(residual_block(x2_bf16, *params))
    assert out_b.shape == (16, dim) and out_b.dtype == jnp.bfloat16
    ref_b = residual_block_ref_f32(x2_bf16.astype(jnp.float32), w1, b1, w2, b2)
    assert jnp.allclose(out_b.astype(jnp.float32), ref_b, atol=5e-2, rtol=5e-2), \
        "bf16-I/O path mismatch vs reference"

    print("KERNEL_OK")
</pallas_src>

<mosaic_0001>
module attributes {stable_mosaic.version = 11 : i64} {
  func.func @residual_block_kernel(%arg0: i32, %arg1: memref<8x128xf32, #tpu.memory_space<vmem>>, %arg2: memref<128x128xbf16, #tpu.memory_space<vmem>>, %arg3: memref<1x128xf32, #tpu.memory_space<vmem>>, %arg4: memref<128x128xbf16, #tpu.memory_space<vmem>>, %arg5: memref<1x128xf32, #tpu.memory_space<vmem>>, %arg6: memref<8x128xf32, #tpu.memory_space<vmem>>) attributes {dimension_semantics = [#tpu.dimension_semantics<parallel>], iteration_bounds = array<i64: 1>, scalar_prefetch = 0 : i64, scratch_operands = 0 : i64, tpu.core_type = #tpu.core_type<tc>, window_params = [{transform_indices = @transform_0, window_bounds = array<i64: 8, 128>}, {pipeline_mode = #tpu.pipeline_mode<synchronous>, transform_indices = @transform_1, window_bounds = array<i64: 128, 128>}, {pipeline_mode = #tpu.pipeline_mode<synchronous>, transform_indices = @transform_2, window_bounds = array<i64: 1, 128>}, {pipeline_mode = #tpu.pipeline_mode<synchronous>, transform_indices = @transform_3, window_bounds = array<i64: 128, 128>}, {pipeline_mode = #tpu.pipeline_mode<synchronous>, transform_indices = @transform_4, window_bounds = array<i64: 1, 128>}, {transform_indices = @transform_5, window_bounds = array<i64: 8, 128>}]} {
    %c0 = arith.constant 0 : index
    %c0_0 = arith.constant 0 : index
    %0 = vector.load %arg1[%c0, %c0_0] : memref<8x128xf32, #tpu.memory_space<vmem>>, vector<8x128xf32>
    %1 = arith.truncf %0 : vector<8x128xf32> to vector<8x128xbf16>
    %c0_1 = arith.constant 0 : index
    %c0_2 = arith.constant 0 : index
    %2 = vector.load %arg2[%c0_1, %c0_2] : memref<128x128xbf16, #tpu.memory_space<vmem>>, vector<128x128xbf16>
    %cst = arith.constant dense<0.000000e+00> : vector<8x128xf32>
    %3 = tpu.matmul %1, %2, %cst {dimension_numbers = #tpu.dot_dimension_numbers<[1], [0], [0], [1], [0, 0, 1, 1], [], []>} : vector<8x128xbf16>, vector<128x128xbf16>, vector<8x128xf32> -> vector<8x128xf32>
    %c0_3 = arith.constant 0 : index
    %c0_4 = arith.constant 0 : index
    %4 = vector.load %arg3[%c0_3, %c0_4] : memref<1x128xf32, #tpu.memory_space<vmem>>, vector<1x128xf32>
    %5 = vector.broadcast %4 : vector<1x128xf32> to vector<8x128xf32>
    %6 = arith.addf %3, %5 : vector<8x128xf32>
    %cst_5 = arith.constant 5.000000e-01 : f32
    %7 = vector.broadcast %cst_5 : f32 to vector<8x128xf32>
    %8 = arith.mulf %7, %6 : vector<8x128xf32>
    %cst_6 = arith.constant 5.000000e-01 : f32
    %9 = vector.broadcast %cst_6 : f32 to vector<8x128xf32>
    %10 = arith.mulf %9, %6 : vector<8x128xf32>
    %11 = math.tanh %10 : vector<8x128xf32>
    %cst_7 = arith.constant 1.000000e+00 : f32
    %12 = vector.broadcast %cst_7 : f32 to vector<8x128xf32>
    %13 = arith.addf %11, %12 : vector<8x128xf32>
    %14 = arith.mulf %8, %13 : vector<8x128xf32>
    %15 = arith.truncf %14 : vector<8x128xf32> to vector<8x128xbf16>
    %c0_8 = arith.constant 0 : index
    %c0_9 = arith.constant 0 : index
    %16 = vector.load %arg4[%c0_8, %c0_9] : memref<128x128xbf16, #tpu.memory_space<vmem>>, vector<128x128xbf16>
    %cst_10 = arith.constant dense<0.000000e+00> : vector<8x128xf32>
    %17 = tpu.matmul %15, %16, %cst_10 {dimension_numbers = #tpu.dot_dimension_numbers<[1], [0], [0], [1], [0, 0, 1, 1], [], []>} : vector<8x128xbf16>, vector<128x128xbf16>, vector<8x128xf32> -> vector<8x128xf32>
    %c0_11 = arith.constant 0 : index
    %c0_12 = arith.constant 0 : index
    %18 = vector.load %arg5[%c0_11, %c0_12] : memref<1x128xf32, #tpu.memory_space<vmem>>, vector<1x128xf32>
    %19 = vector.broadcast %18 : vector<1x128xf32> to vector<8x128xf32>
    %20 = arith.addf %17, %19 : vector<8x128xf32>
    %21 = arith.addf %0, %20 : vector<8x128xf32>
    %cst_13 = arith.constant 5.000000e-01 : f32
    %22 = vector.broadcast %cst_13 : f32 to vector<8x128xf32>
    %23 = arith.mulf %22, %21 : vector<8x128xf32>
    %cst_14 = arith.constant 5.000000e-01 : f32
    %24 = vector.broadcast %cst_14 : f32 to vector<8x128xf32>
    %25 = arith.mulf %24, %21 : vector<8x128xf32>
    %26 = math.tanh %25 : vector<8x128xf32>
    %cst_15 = arith.constant 1.000000e+00 : f32
    %27 = vector.broadcast %cst_15 : f32 to vector<8x128xf32>
    %28 = arith.addf %26, %27 : vector<8x128xf32>
    %29 = arith.mulf %23, %28 : vector<8x128xf32>
    %c0_16 = arith.constant 0 : index
    %c0_17 = arith.constant 0 : index
    %30 = vector.load %arg6[%c0_16, %c0_17] : memref<8x128xf32, #tpu.memory_space<vmem>>, vector<8x128xf32>
    tpu.vector_store %arg6[%c0_16, %c0_17], %29 {strides = array<i32>} : memref<8x128xf32, #tpu.memory_space<vmem>>, vector<8x128xf32>,
    return
  }
  func.func @transform_0(%arg0: i32) -> (i32, i32) {
    %c0_i32 = arith.constant 0 : i32
    %c0_i32_0 = arith.constant 0 : i32
    return %arg0, %c0_i32 : i32, i32
  }
  func.func @transform_1(%arg0: i32) -> (i32, i32) {
    %c0_i32 = arith.constant 0 : i32
    %c0_i32_0 = arith.constant 0 : i32
    %c0_i32_1 = arith.constant 0 : i32
    return %c0_i32, %c0_i32_0 : i32, i32
  }
  func.func @transform_2(%arg0: i32) -> (i32, i32) {
    %c0_i32 = arith.constant 0 : i32
    %c0_i32_0 = arith.constant 0 : i32
    %c0_i32_1 = arith.constant 0 : i32
    return %c0_i32, %c0_i32_0 : i32, i32
  }
  func.func @transform_3(%arg0: i32) -> (i32, i32) {
    %c0_i32 = arith.constant 0 : i32
    %c0_i32_0 = arith.constant 0 : i32
    %c0_i32_1 = arith.constant 0 : i32
    return %c0_i32, %c0_i32_0 : i32, i32
  }
  func.func @transform_4(%arg0: i32) -> (i32, i32) {
    %c0_i32 = arith.constant 0 : i32
    %c0_i32_0 = arith.constant 0 : i32
    %c0_i32_1 = arith.constant 0 : i32
    return %c0_i32, %c0_i32_0 : i32, i32
  }
  func.func @transform_5(%arg0: i32) -> (i32, i32) {
    %c0_i32 = arith.constant 0 : i32
    %c0_i32_0 = arith.constant 0 : i32
    return %arg0, %c0_i32 : i32, i32
  }
}

</mosaic_0001>

<llo_original>
// kernel: residual_block.1
$region0: #{residual_block.1}
  #allocation0 [shape = 'u32[]', space=smem, size = 0x4, offset = 0x4, fixed_abs, tag = 'smem constant byte address 0x4 - core index']
  #allocation1 [shape = 'u32[144,128]{1,0:T(1,128)}', space=vmem, size = 0x12000, scoped, tag = 'internal scratch']
  %s0 = inlined_call_operand.vmem [shape: f32[8,128], index: 0, kind: input, shape index: {}]
  %s1 = inlined_call_operand.hbm [shape: bf16[128,128], index: 1, kind: input, shape index: {}]
  %s2 = inlined_call_operand.vmem [shape: f32[1,128], index: 2, kind: input, shape index: {}]
  %s3 = inlined_call_operand.hbm [shape: bf16[128,128], index: 3, kind: input, shape index: {}]
  %s4 = inlined_call_operand.vmem [shape: f32[1,128], index: 4, kind: input, shape index: {}]
  %s5 = inlined_call_operand.hbm [shape: f32[8,128], index: 5, kind: output, shape index: {}]
  %s6 = sld [smem:[#allocation0]]
  $region38: #{residual_block.1} parent=0
    _
  %s8 = ssub.s32 1, %s6
  %s9 = scalar_select 0, %s8, %s6
  $region1: #{residual_block.1} parent=0
    #allocation2 [shape = 'u8[32768]{0}', space=vmem, size = 0x8000, scoped, tag = 'input window, operand 1, single buffered']
    #allocation3 [shape = 's32[1]{0}', space=sflag, size = 0x4, scoped, tag = 'scoped memory for residual_block.1']
    #allocation4 [shape = 's32[1]{0}', space=sflag, size = 0x4, scoped, tag = 'scoped memory for residual_block.1']
    #allocation5 [shape = 'u8[32768]{0}', space=vmem, size = 0x8000, scoped, tag = 'input window, operand 3, single buffered']
    #allocation6 [shape = 's32[1]{0}', space=sflag, size = 0x4, scoped, tag = 'scoped memory for residual_block.1']
    #allocation7 [shape = 'u8[4096]{0}', space=vmem, size = 0x1000, scoped, tag = 'output window, operand 0, single buffered']
    %10 = vsyncpa [#allocation3], 0
    %11 = vsyncpa [#allocation6], 0
    %12 = vsyncpa [#allocation4], 0
    // Predicated region
    $region2: #{residual_block.1} parent=1 // pred_check
      _
    $region3: #{residual_block.1} parent=1 // pred_check_branch
      %14 = sbr.rel (0) target = $region5
    $region4: #{residual_block.1} parent=1 // pred_region
      _
    $region5: #{residual_block.1} parent=1 // pred_fallthru
      _
    // Predicated region
    $region6: #{residual_block.1} parent=1 // pred_check
      _
    $region7: #{residual_block.1} parent=1 // pred_check_branch
      %16 = sbr.rel (0) target = $region9
    $region8: #{residual_block.1} parent=1 // pred_region
      %s18 = ssub.s32 1024, 1024
      %19 = vsyncadd [#allocation3], %s18
      %s20 = sshll.u32 [#allocation2], 4
      %s21 = int_to_ptr.vmem [resolvable:$true] %s20
      %26 = dma.hbm_to_vmem [thread:$0]  %s1, 1024, %s21, [#allocation3], 64, 64, 4
    $region9: #{residual_block.1} parent=1 // pred_fallthru
      _
    // Predicated region
    $region10: #{residual_block.1} parent=1 // pred_check
      _
    $region11: #{residual_block.1} parent=1 // pred_check_branch
      %28 = sbr.rel (0) target = $region13
    $region12: #{residual_block.1} parent=1 // pred_region
      _
    $region13: #{residual_block.1} parent=1 // pred_fallthru
      _
    // Predicated region
    $region14: #{residual_block.1} parent=1 // pred_check
      _
    $region15: #{residual_block.1} parent=1 // pred_check_branch
      %30 = sbr.rel (0) target = $region17
    $region16: #{residual_block.1} parent=1 // pred_region
      %s32 = ssub.s32 1024, 1024
      %33 = vsyncadd [#allocation6], %s32
      %s34 = sshll.u32 [#allocation5], 4
      %s35 = int_to_ptr.vmem [resolvable:$true] %s34
      %40 = dma.hbm_to_vmem [thread:$0]  %s3, 1024, %s35, [#allocation6], 64, 64, 4
    $region17: #{residual_block.1} parent=1 // pred_fallthru
      _
    // Predicated region
    $region18: #{residual_block.1} parent=1 // pred_check
      _
    $region19: #{residual_block.1} parent=1 // pred_check_branch
      %42 = sbr.rel (0) target = $region21
    $region20: #{residual_block.1} parent=1 // pred_region
      _
    $region21: #{residual_block.1} parent=1 // pred_fallthru
      _
    // Predicated region
    $region22: #{residual_block.1} parent=1 // pred_check
      _
    $region23: #{residual_block.1} parent=1 // pred_check_branch
      %44 = sbr.rel (0) target = $region25
    $region24: #{residual_block.1} parent=1 // pred_region
      %45 = dma.done [#allocation3], 1024
    $region25: #{residual_block.1} parent=1 // pred_fallthru
      _
    // Predicated region
    $region26: #{residual_block.1} parent=1 // pred_check
      _
    $region27: #{residual_block.1} parent=1 // pred_check_branch
      %47 = sbr.rel (0) target = $region29
    $region28: #{residual_block.1} parent=1 // pred_region
      %48 = dma.done [#allocation6], 1024
    $region29: #{residual_block.1} parent=1 // pred_fallthru
      _
    %v50 = vld [vmem:[%s0] sm:$0xff]
    %v51 = vpack.c.bf16 %v50, %v50
    %v52 = vld [vmem:[#allocation2] sm:$0xf]
    %v53 = vld [vmem:[#allocation2 + $0x4] sm:$0xf]
    %v54 = vld [vmem:[#allocation2 + $0x8] sm:$0xf]
    %v55 = vld [vmem:[#allocation2 + $0xc] sm:$0xf]
    %v56 = vld [vmem:[#allocation2 + $0x10] sm:$0xf]
    %v57 = vld [vmem:[#allocation2 + $0x14] sm:$0xf]
    %v58 = vld [vmem:[#allocation2 + $0x18] sm:$0xf]
    %v59 = vld [vmem:[#allocation2 + $0x1c] sm:$0xf]
    %v60 = vld [vmem:[#allocation2 + $0x20] sm:$0xf]
    %v61 = vld [vmem:[#allocation2 + $0x24] sm:$0xf]
    %v62 = vld [vmem:[#allocation2 + $0x28] sm:$0xf]
    %v63 = vld [vmem:[#allocation2 + $0x2c] sm:$0xf]
    %v64 = vld [vmem:[#allocation2 + $0x30] sm:$0xf]
    %v65 = vld [vmem:[#allocation2 + $0x34] sm:$0xf]
    %v66 = vld [vmem:[#allocation2 + $0x38] sm:$0xf]
    %v67 = vld [vmem:[#allocation2 + $0x3c] sm:$0xf]
    %v68 = vld [vmem:[%s2] sm:$0x1]
    %v70 = vlaneseq
    %v71 = vshrl.u32 %v70, 7
    %v72 = vsub.s32 0, %v71
    %v73 = vrot.slane %v68, %v72
    %v91 = vunpack.c.l.b16 %v52
    %v92 = vunpack.c.l.b16 %v53
    %v93 = vunpack.c.l.b16 %v54
    %v94 = vunpack.c.l.b16 %v55
    %v95 = vunpack.c.l.b16 %v56
    %v96 = vunpack.c.l.b16 %v57
    %v97 = vunpack.c.l.b16 %v58
    %v98 = vunpack.c.l.b16 %v59
    %v99 = vunpack.c.l.b16 %v60
    %v100 = vunpack.c.l.b16 %v61
    %v101 = vunpack.c.l.b16 %v62
    %v102 = vunpack.c.l.b16 %v63
    %v103 = vunpack.c.l.b16 %v64
    %v104 = vunpack.c.l.b16 %v65
    %v105 = vunpack.c.l.b16 %v66
    %v106 = vunpack.c.l.b16 %v67
    %v107 = vpack.c.b16 %v92, %v91
    %v108 = vpack.c.b16 %v94, %v93
    %v109 = vpack.c.b16 %v96, %v95
    %v110 = vpack.c.b16 %v98, %v97
    %v111 = vpack.c.b16 %v100, %v99
    %v112 = vpack.c.b16 %v102, %v101
    %v113 = vpack.c.b16 %v104, %v103
    %v114 = vpack.c.b16 %v106, %v105
    %123 = vmatprep.subr.bf16.mxu0 0
    %124 = vmatpush1.bf16.msra.mxu0 %v107
    %125 = vmatprep.subr.bf16.mxu0 0
    %126 = vmatpush1.bf16.msra.mxu0 %v108
    %127 = vmatprep.subr.bf16.mxu0 0
    %128 = vmatpush1.bf16.msra.mxu0 %v109
    %129 = vmatprep.subr.bf16.mxu0 0
    %130 = vmatpush1.bf16.msra.mxu0 %v110
    %131 = vmatprep.subr.bf16.mxu0 0
    %132 = vmatpush1.bf16.msra.mxu0 %v111
    %133 = vmatprep.subr.bf16.mxu0 0
    %134 = vmatpush1.bf16.msra.mxu0 %v112
    %135 = vmatprep.subr.bf16.mxu0 0
    %136 = vmatpush1.bf16.msra.mxu0 %v113
    %137 = vmatprep.subr.bf16.mxu0 0
    %138 = vmatpush1.bf16.msra.mxu0 %v114
    %139 = vmatprep.subr.bf16.mxu0 0
    %140 = vmatpush1.bf16.msra.mxu0 0
    %141 = vmatprep.subr.bf16.mxu0 0
    %142 = vmatpush1.bf16.msra.mxu0 0
    %143 = vmatprep.subr.bf16.mxu0 0
    %144 = vmatpush1.bf16.msra.mxu0 0
    %145 = vmatprep.subr.bf16.mxu0 0
    %146 = vmatpush1.bf16.msra.mxu0 0
    %147 = vmatprep.subr.bf16.mxu0 0
    %148 = vmatpush1.bf16.msra.mxu0 0
    %149 = vmatprep.subr.bf16.mxu0 0
    %150 = vmatpush1.bf16.msra.mxu0 0
    %151 = vmatprep.subr.bf16.mxu0 0
    %152 = vmatpush1.bf16.msra.mxu0 0
    %153 = vmatprep.subr.bf16.mxu0 0
    %154 = vmatpush1.bf16.msra.mxu0 0
    %155 = vmatprep.mubr.bf16.mxu0 0
    %156 = vmatmul.mubr.bf16.gmra.mrb[0].mxu0 %v51
    %v157 = vpop.f32.mrb[0].mxu0
    %v158 = vadd.f32 %v73, %v157
    %v159 = vpop.f32.mrb[0].mxu0
    %v160 = vpop.f32.mrb[0].mxu0
    %v161 = vpop.f32.mrb[0].mxu0
    %162 = vdwg.mxu0
    %v163 = vmul.f32 %v158, 0.5
    %v164 = vtanh.pop %v163
    %v165 = vadd.f32 %v164, 1.0
    %v166 = vmul.f32 %v163, %v165
    %v167 = vpack.c.bf16 %v166, %v166
    %v168 = vld [vmem:[#allocation5] sm:$0xf]
    %v169 = vld [vmem:[#allocation5 + $0x4] sm:$0xf]
    %v170 = vld [vmem:[#allocation5 + $0x8] sm:$0xf]
    %v171 = vld [vmem:[#allocation5 + $0xc] sm:$0xf]
    %v172 = vld [vmem:[#allocation5 + $0x10] sm:$0xf]
    %v173 = vld [vmem:[#allocation5 + $0x14] sm:$0xf]
    %v174 = vld [vmem:[#allocation5 + $0x18] sm:$0xf]
    %v175 = vld [vmem:[#allocation5 + $0x1c] sm:$0xf]
    %v176 = vld [vmem:[#allocation5 + $0x20] sm:$0xf]
    %v177 = vld [vmem:[#allocation5 + $0x24] sm:$0xf]
    %v178 = vld [vmem:[#allocation5 + $0x28] sm:$0xf]
    %v179 = vld [vmem:[#allocation5 + $0x2c] sm:$0xf]
    %v180 = vld [vmem:[#allocation5 + $0x30] sm:$0xf]
    %v181 = vld [vmem:[#allocation5 + $0x34] sm:$0xf]
    %v182 = vld [vmem:[#allocation5 + $0x38] sm:$0xf]
    %v183 = vld [vmem:[#allocation5 + $0x3c] sm:$0xf]
    %v184 = vld [vmem:[%s4] sm:$0x1]
    %v186 = vlaneseq
    %v187 = vshrl.u32 %v186, 7
    %v188 = vsub.s32 0, %v187
    %v189 = vrot.slane %v184, %v188
    %v207 = vunpack.c.l.b16 %v168
    %v208 = vunpack.c.l.b16 %v169
    %v209 = vunpack.c.l.b16 %v170
    %v210 = vunpack.c.l.b16 %v171
    %v211 = vunpack.c.l.b16 %v172
    %v212 = vunpack.c.l.b16 %v173
    %v213 = vunpack.c.l.b16 %v174
    %v214 = vunpack.c.l.b16 %v175
    %v215 = vunpack.c.l.b16 %v176
    %v216 = vunpack.c.l.b16 %v177
    %v217 = vunpack.c.l.b16 %v178
    %v218 = vunpack.c.l.b16 %v179
    %v219 = vunpack.c.l.b16 %v180
    %v220 = vunpack.c.l.b16 %v181
    %v221 = vunpack.c.l.b16 %v182
    %v222 = vunpack.c.l.b16 %v183
    %v223 = vpack.c.b16 %v208, %v207
    %v224 = vpack.c.b16 %v210, %v209
    %v225 = vpack.c.b16 %v212, %v211
    %v226 = vpack.c.b16 %v214, %v213
    %v227 = vpack.c.b16 %v216, %v215
    %v228 = vpack.c.b16 %v218, %v217
    %v229 = vpack.c.b16 %v220, %v219
    %v230 = vpack.c.b16 %v222, %v221
    %239 = vmatprep.subr.bf16.mxu0 0
    %240 = vmatpush1.bf16.msra.mxu0 %v223
    %241 = vmatprep.subr.bf16.mxu0 0
    %242 = vmatpush1.bf16.msra.mxu0 %v224
    %243 = vmatprep.subr.bf16.mxu0 0
    %244 = vmatpush1.bf16.msra.mxu0 %v225
    %245 = vmatprep.subr.bf16.mxu0 0
    %246 = vmatpush1.bf16.msra.mxu0 %v226
    %247 = vmatprep.subr.bf16.mxu0 0
    %248 = vmatpush1.bf16.msra.mxu0 %v227
    %249 = vmatprep.subr.bf16.mxu0 0
    %250 = vmatpush1.bf16.msra.mxu0 %v228
    %251 = vmatprep.subr.bf16.mxu0 0
    %252 = vmatpush1.bf16.msra.mxu0 %v229
    %253 = vmatprep.subr.bf16.mxu0 0
    %254 = vmatpush1.bf16.msra.mxu0 %v230
    %255 = vmatprep.subr.bf16.mxu0 0
    %256 = vmatpush1.bf16.msra.mxu0 0
    %257 = vmatprep.subr.bf16.mxu0 0
    %258 = vmatpush1.bf16.msra.mxu0 0
    %259 = vmatprep.subr.bf16.mxu0 0
    %260 = vmatpush1.bf16.msra.mxu0 0
    %261 = vmatprep.subr.bf16.mxu0 0
    %262 = vmatpush1.bf16.msra.mxu0 0
    %263 = vmatprep.subr.bf16.mxu0 0
    %264 = vmatpush1.bf16.msra.mxu0 0
    %265 = vmatprep.subr.bf16.mxu0 0
    %266 = vmatpush1.bf16.msra.mxu0 0
    %267 = vmatprep.subr.bf16.mxu0 0
    %268 = vmatpush1.bf16.msra.mxu0 0
    %269 = vmatprep.subr.bf16.mxu0 0
    %270 = vmatpush1.bf16.msra.mxu0 0
    %271 = vmatprep.mubr.bf16.mxu0 0
    %272 = vmatmul.mubr.bf16.gmra.mrb[0].mxu0 %v167
    %v273 = vpop.f32.mrb[0].mxu0
    %v274 = vadd.f32 %v189, %v273
    %v275 = vpop.f32.mrb[0].mxu0
    %v276 = vpop.f32.mrb[0].mxu0
    %v277 = vpop.f32.mrb[0].mxu0
    %278 = vdwg.mxu0
    %v279 = vadd.f32 %v50, %v274
    %v280 = vmul.f32 %v279, 0.5
    %v281 = vtanh.pop %v280
    %v282 = vadd.f32 %v281, 1.0
    %v283 = vmul.f32 %v280, %v282
    %284 = vst [vmem:[#allocation7] sm:$0xff] %v283
    // Predicated region
    $region30: #{residual_block.1} parent=1 // pred_check
      _
    $region31: #{residual_block.1} parent=1 // pred_check_branch
      %286 = sbr.rel (0) target = $region33
    $region32: #{residual_block.1} parent=1 // pred_region
      %s288 = ssub.s32 128, 128
      %289 = vsyncadd [#allocation4], %s288
      %s291 = sshll.u32 [#allocation7], 4
      %s292 = int_to_ptr.vmem [resolvable:$true] %s291
      %294 = dma.vmem_to_hbm [thread:$0]  %s292, 128, %s5, [#allocation4]
    $region33: #{residual_block.1} parent=1 // pred_fallthru
      _
    // Predicated region
    $region34: #{residual_block.1} parent=1 // pred_check
      _
    $region35: #{residual_block.1} parent=1 // pred_check_branch
      %296 = sbr.rel (0) target = $region37
    $region36: #{residual_block.1} parent=1 // pred_region
      %297 = dma.done [#allocation4], 128
    $region37: #{residual_block.1} parent=1 // pred_fallthru
      _
    %298 = vsyncpa [#allocation3], 1
    %299 = vsyncpa [#allocation6], 1
    %300 = vsyncpa [#allocation4], 1

</llo_original>
